<compile_context>
chip_gen: v5e
topology: v5e:2x2
jax: 0.10.0
libtpu: 0.0.40
codegen_flags: <defaults>
</compile_context>

<pallas_src>
import functools
import math

import jax
import jax.numpy as jnp
from jax.experimental import pallas as pl
from jax.experimental.pallas import tpu as pltpu


def _mpo_loss_kernel(scal_ref, bvalid_ref, q_ref, lp_ref,
                     policy_ref, dual_ref,
                     norm_acc_ref, wlp_acc_ref, *, masked):
    # Read SMEM scalars up front, before any vector work / DMA waits.
    inv_eta = scal_ref[0]
    eta = scal_ref[1]
    c = scal_ref[2]          # epsilon - log(num_actions), folded at trace time
    inv_b = scal_ref[3]      # 1 / true_batch_size
    b_valid = bvalid_ref[0]  # true batch size (for masking padded lanes)

    t = pl.program_id(0)

    @pl.when(t == 0)
    def _init():
        norm_acc_ref[...] = jnp.zeros_like(norm_acc_ref)
        wlp_acc_ref[...] = jnp.zeros_like(wlp_acc_ref)

    # Inputs stream in their native dtype; cast once in-register (free VPU work).
    q = q_ref[...].astype(jnp.float32)       # [N, TILE_B]
    lp = lp_ref[...].astype(jnp.float32)     # [N, TILE_B]

    scaled = q * inv_eta
    m = jnp.max(scaled, axis=0, keepdims=True)            # [1, TILE_B]
    u = jnp.exp(scaled - m)                                # single exp per tile
    denom = jnp.sum(u, axis=0, keepdims=True)              # [1, TILE_B]
    normalizer = m + jnp.log(denom)                        # logsumexp over samples
    weights = u * pl.reciprocal(denom, approx=True)        # softmax, no 2nd exp
    wlp = jnp.sum(weights * lp, axis=0, keepdims=True)     # [1, TILE_B]

    if masked:
        tile_b = q.shape[1]
        col = jax.lax.broadcasted_iota(jnp.int32, (1, tile_b), 1) + t * tile_b
        valid = col < b_valid
        normalizer = jnp.where(valid, normalizer, 0.0)
        wlp = jnp.where(valid, wlp, 0.0)

    # Per-lane partial sums; different tiles fold into the same lanes, which is
    # fine because we reduce over all lanes once at the end.
    norm_acc_ref[...] += normalizer
    wlp_acc_ref[...] += wlp

    @pl.when(t == pl.num_programs(0) - 1)
    def _finalize():
        sum_norm = jnp.sum(norm_acc_ref[...])
        sum_wlp = jnp.sum(wlp_acc_ref[...])
        # dual_loss = eta * (epsilon + mean(normalizer) - log(num_actions))
        dual_ref[0, 0] = eta * (c + sum_norm * inv_b)
        # policy_loss = -mean(sum_k weights * log_p)
        policy_ref[0, 0] = -sum_wlp * inv_b


def _pick_tile_b(b, n, itemsize, max_tile_b=2048,
                 vmem_budget=8 * 1024 * 1024):
    """Lane-dense tile (multiple of 128) sized for v7x's smaller VMEM."""
    b128 = pl.cdiv(b, 128) * 128
    # 2 streamed inputs x 2 pipeline buffers x (N, TILE_B) must stay well under
    # budget (v7x: 64 MiB physical / 32 MiB default-scoped VMEM).
    max_by_budget = max(128, (vmem_budget // (4 * n * itemsize)) // 128 * 128)
    return max(128, min(max_tile_b, b128, max_by_budget))


def mpo_loss(q_values, action_log_p, eta_raw, epsilon=0.1, max_tile_b=2048):
    """Pallas-backed MPOLoss.forward.

    Args:
      q_values:      [N, B, 1] critic values (treated as detached).
      action_log_p:  [N, B, 1] log-probabilities.
      eta_raw:       raw (pre-softplus) learnable eta parameter (scalar).
      epsilon:       KL budget (float).

    Returns:
      (policy_loss, dual_loss) scalars (f32).
    """
    n, b, _ = q_values.shape
    q2 = q_values.reshape(n, b)          # keep native dtype; cast in-kernel
    lp2 = action_log_p.reshape(n, b)

    itemsize = max(jnp.dtype(q2.dtype).itemsize, jnp.dtype(lp2.dtype).itemsize)
    tile_b = _pick_tile_b(b, n, itemsize, max_tile_b)

    b_pad = pl.cdiv(b, tile_b) * tile_b
    if b_pad != b:                       # pad batch remainder; kernel masks it
        q2 = jnp.pad(q2, ((0, 0), (0, b_pad - b)))
        lp2 = jnp.pad(lp2, ((0, 0), (0, b_pad - b)))
    num_tiles = b_pad // tile_b

    # Learnable(1.0, positive=True): eta = softplus(raw).  eps - log(N) folds
    # into one trace-time constant; 1/eta and 1/B precomputed so the kernel
    # does no scalar divides.
    eta = jax.nn.softplus(jnp.asarray(eta_raw, jnp.float32))
    scalars = jnp.stack([
        1.0 / eta,
        eta,
        jnp.float32(epsilon) - jnp.float32(math.log(n)),
        jnp.float32(1.0 / b),
    ])
    b_valid = jnp.asarray([b], dtype=jnp.int32)

    kernel = functools.partial(_mpo_loss_kernel, masked=(b_pad != b))

    policy, dual = pl.pallas_call(
        kernel,
        grid=(num_tiles,),
        out_shape=(
            jax.ShapeDtypeStruct((1, 1), jnp.float32),   # policy_loss
            jax.ShapeDtypeStruct((1, 1), jnp.float32),   # dual_loss
        ),
        in_specs=[
            pl.BlockSpec(memory_space=pltpu.SMEM),       # [inv_eta, eta, c, 1/B]
            pl.BlockSpec(memory_space=pltpu.SMEM),       # true batch size
            pl.BlockSpec((n, tile_b), lambda t: (0, t)),  # q tile  [N, TILE_B]
            pl.BlockSpec((n, tile_b), lambda t: (0, t)),  # logp tile
        ],
        out_specs=(
            pl.BlockSpec(memory_space=pltpu.SMEM),
            pl.BlockSpec(memory_space=pltpu.SMEM),
        ),
        scratch_shapes=[
            pltpu.VMEM((1, tile_b), jnp.float32),   # per-lane sum of normalizer
            pltpu.VMEM((1, tile_b), jnp.float32),   # per-lane sum of weighted log p
        ],
        compiler_params=pltpu.CompilerParams(
            dimension_semantics=("arbitrary",)),    # reduction over batch tiles
    )(scalars, b_valid, q2, lp2)

    return policy[0, 0], dual[0, 0]


def mpo_loss_reference(q_values, action_log_p, eta_raw, epsilon=0.1):
    """Pure-JAX reference mirroring the PyTorch forward."""
    eta = jax.nn.softplus(jnp.asarray(eta_raw, jnp.float32))
    q = q_values.astype(jnp.float32) * (1.0 / eta)
    normalizer = jax.scipy.special.logsumexp(q, axis=0)           # [B, 1]
    num_actions = jnp.float32(q_values.shape[0])
    dual_loss = eta * (epsilon + jnp.mean(normalizer) - jnp.log(num_actions))
    weights = jnp.exp(q - normalizer)
    weighted_log_p = jnp.sum(weights * action_log_p.astype(jnp.float32), axis=0)
    policy_loss = -jnp.mean(weighted_log_p)
    return policy_loss, dual_loss


if __name__ == "__main__":
    key = jax.random.PRNGKey(0)
    k1, k2 = jax.random.split(key)

    n_action_samples, state_batch = 8, 16
    q_values = jax.random.normal(
        k1, (n_action_samples, state_batch, 1), dtype=jnp.float32)
    action_log_p = -jax.nn.softplus(
        jax.random.normal(k2, (n_action_samples, state_batch, 1),
                          dtype=jnp.float32))  # negative log-probs-ish

    # Deterministic init matching Learnable(1.0, positive=True):
    # raw = softplus^{-1}(1.0)  =>  softplus(raw) == 1.0
    eta_raw = jnp.asarray(math.log(math.expm1(1.0)), dtype=jnp.float32)
    epsilon = 0.1

    policy_loss, dual_loss = mpo_loss(q_values, action_log_p, eta_raw, epsilon)
    jax.block_until_ready((policy_loss, dual_loss))

    ref_policy, ref_dual = mpo_loss_reference(q_values, action_log_p, eta_raw,
                                              epsilon)
    # policy loss uses the approximate EUP reciprocal for the softmax weights,
    # so allow a slightly looser tolerance there.
    assert jnp.allclose(policy_loss, ref_policy, rtol=5e-3, atol=5e-3), (
        policy_loss, ref_policy)
    assert jnp.allclose(dual_loss, ref_dual, rtol=1e-5, atol=1e-5), (
        dual_loss, ref_dual)

    print("KERNEL_OK")
</pallas_src>

<mosaic_0001>
module attributes {stable_mosaic.version = 11 : i64} {
  func.func @_mpo_loss_kernel(%arg0: i32, %arg1: memref<4xf32, #tpu.memory_space<smem>>, %arg2: memref<1xi32, #tpu.memory_space<smem>>, %arg3: memref<8x128xf32, #tpu.memory_space<vmem>>, %arg4: memref<8x128xf32, #tpu.memory_space<vmem>>, %arg5: memref<1x1xf32, #tpu.memory_space<smem>>, %arg6: memref<1x1xf32, #tpu.memory_space<smem>>, %arg7: memref<1x128xf32, #tpu.memory_space<vmem>>, %arg8: memref<1x128xf32, #tpu.memory_space<vmem>>) attributes {dimension_semantics = [#tpu.dimension_semantics<arbitrary>], iteration_bounds = array<i64: 1>, scalar_prefetch = 0 : i64, scratch_operands = 2 : i64, tpu.core_type = #tpu.core_type<tc>, window_params = [{transform_indices = @transform_0, window_bounds = array<i64: 4>}, {transform_indices = @transform_1, window_bounds = array<i64: 1>}, {transform_indices = @transform_2, window_bounds = array<i64: 8, 128>}, {transform_indices = @transform_3, window_bounds = array<i64: 8, 128>}, {transform_indices = @transform_4, window_bounds = array<i64: 1, 1>}, {transform_indices = @transform_5, window_bounds = array<i64: 1, 1>}]} {
    %c0 = arith.constant 0 : index
    %0 = memref.load %arg1[%c0] : memref<4xf32, #tpu.memory_space<smem>>
    %c1 = arith.constant 1 : index
    %1 = memref.load %arg1[%c1] : memref<4xf32, #tpu.memory_space<smem>>
    %c2 = arith.constant 2 : index
    %2 = memref.load %arg1[%c2] : memref<4xf32, #tpu.memory_space<smem>>
    %c3 = arith.constant 3 : index
    %3 = memref.load %arg1[%c3] : memref<4xf32, #tpu.memory_space<smem>>
    %c0_0 = arith.constant 0 : index
    %4 = memref.load %arg2[%c0_0] : memref<1xi32, #tpu.memory_space<smem>>
    %c0_i32 = arith.constant 0 : i32
    %5 = arith.cmpi eq, %arg0, %c0_i32 : i32
    %6 = arith.extui %5 : i1 to i32
    %c0_i32_1 = arith.constant 0 : i32
    %7 = arith.cmpi ne, %6, %c0_i32_1 : i32
    scf.if %7 {
      %cst_20 = arith.constant 0.000000e+00 : f32
      %46 = vector.broadcast %cst_20 : f32 to vector<1x128xf32>
      %c0_21 = arith.constant 0 : index
      %c0_22 = arith.constant 0 : index
      %47 = vector.load %arg7[%c0_21, %c0_22] : memref<1x128xf32, #tpu.memory_space<vmem>>, vector<1x128xf32>
      tpu.vector_store %arg7[%c0_21, %c0_22], %46 {strides = array<i32>} : memref<1x128xf32, #tpu.memory_space<vmem>>, vector<1x128xf32>,
      %cst_23 = arith.constant 0.000000e+00 : f32
      %48 = vector.broadcast %cst_23 : f32 to vector<1x128xf32>
      %c0_24 = arith.constant 0 : index
      %c0_25 = arith.constant 0 : index
      %49 = vector.load %arg8[%c0_24, %c0_25] : memref<1x128xf32, #tpu.memory_space<vmem>>, vector<1x128xf32>
      tpu.vector_store %arg8[%c0_24, %c0_25], %48 {strides = array<i32>} : memref<1x128xf32, #tpu.memory_space<vmem>>, vector<1x128xf32>,
    } else {
    }
    %c0_2 = arith.constant 0 : index
    %c0_3 = arith.constant 0 : index
    %8 = vector.load %arg3[%c0_2, %c0_3] : memref<8x128xf32, #tpu.memory_space<vmem>>, vector<8x128xf32>
    %c0_4 = arith.constant 0 : index
    %c0_5 = arith.constant 0 : index
    %9 = vector.load %arg4[%c0_4, %c0_5] : memref<8x128xf32, #tpu.memory_space<vmem>>, vector<8x128xf32>
    %10 = vector.broadcast %0 : f32 to vector<8x128xf32>
    %11 = arith.mulf %8, %10 : vector<8x128xf32>
    %cst = arith.constant dense<0xFF800000> : vector<128xf32>
    %12 = vector.multi_reduction <maximumf>, %11, %cst [0] : vector<8x128xf32> to vector<128xf32>
    %13 = vector.shape_cast %12 : vector<128xf32> to vector<1x128xf32>
    %14 = vector.broadcast %13 : vector<1x128xf32> to vector<8x128xf32>
    %15 = arith.subf %11, %14 : vector<8x128xf32>
    %16 = math.exp %15 : vector<8x128xf32>
    %cst_6 = arith.constant dense<0.000000e+00> : vector<128xf32>
    %17 = vector.multi_reduction <add>, %16, %cst_6 [0] : vector<8x128xf32> to vector<128xf32>
    %18 = vector.shape_cast %17 : vector<128xf32> to vector<1x128xf32>
    %19 = math.log %18 : vector<1x128xf32>
    %20 = arith.addf %13, %19 : vector<1x128xf32>
    %21 = tpu.reciprocal %18 {approx = true} : vector<1x128xf32> -> vector<1x128xf32>
    %22 = vector.broadcast %21 : vector<1x128xf32> to vector<8x128xf32>
    %23 = arith.mulf %16, %22 : vector<8x128xf32>
    %24 = arith.mulf %23, %9 : vector<8x128xf32>
    %cst_7 = arith.constant dense<0.000000e+00> : vector<128xf32>
    %25 = vector.multi_reduction <add>, %24, %cst_7 [0] : vector<8x128xf32> to vector<128xf32>
    %26 = vector.shape_cast %25 : vector<128xf32> to vector<1x128xf32>
    %27 = tpu.iota {dimensions = array<i32: 1>} : vector<1x128xi32>
    %c128_i32 = arith.constant 128 : i32
    %28 = arith.muli %arg0, %c128_i32 : i32
    %29 = vector.broadcast %28 : i32 to vector<1x128xi32>
    %30 = arith.addi %27, %29 : vector<1x128xi32>
    %31 = vector.broadcast %4 : i32 to vector<1x128xi32>
    %32 = arith.cmpi slt, %30, %31 : vector<1x128xi32>
    %cst_8 = arith.constant 0.000000e+00 : f32
    %33 = vector.broadcast %cst_8 : f32 to vector<1x128xf32>
    %34 = arith.select %32, %20, %33 : vector<1x128xi1>, vector<1x128xf32>
    %cst_9 = arith.constant 0.000000e+00 : f32
    %35 = vector.broadcast %cst_9 : f32 to vector<1x128xf32>
    %36 = arith.select %32, %26, %35 : vector<1x128xi1>, vector<1x128xf32>
    %c0_10 = arith.constant 0 : index
    %c0_11 = arith.constant 0 : index
    %37 = vector.load %arg7[%c0_10, %c0_11] : memref<1x128xf32, #tpu.memory_space<vmem>>, vector<1x128xf32>
    %38 = arith.addf %37, %34 : vector<1x128xf32>
    %c0_12 = arith.constant 0 : index
    %c0_13 = arith.constant 0 : index
    %39 = vector.load %arg7[%c0_12, %c0_13] : memref<1x128xf32, #tpu.memory_space<vmem>>, vector<1x128xf32>
    tpu.vector_store %arg7[%c0_12, %c0_13], %38 {strides = array<i32>} : memref<1x128xf32, #tpu.memory_space<vmem>>, vector<1x128xf32>,
    %c0_14 = arith.constant 0 : index
    %c0_15 = arith.constant 0 : index
    %40 = vector.load %arg8[%c0_14, %c0_15] : memref<1x128xf32, #tpu.memory_space<vmem>>, vector<1x128xf32>
    %41 = arith.addf %40, %36 : vector<1x128xf32>
    %c0_16 = arith.constant 0 : index
    %c0_17 = arith.constant 0 : index
    %42 = vector.load %arg8[%c0_16, %c0_17] : memref<1x128xf32, #tpu.memory_space<vmem>>, vector<1x128xf32>
    tpu.vector_store %arg8[%c0_16, %c0_17], %41 {strides = array<i32>} : memref<1x128xf32, #tpu.memory_space<vmem>>, vector<1x128xf32>,
    %c0_i32_18 = arith.constant 0 : i32
    %43 = arith.cmpi eq, %arg0, %c0_i32_18 : i32
    %44 = arith.extui %43 : i1 to i32
    %c0_i32_19 = arith.constant 0 : i32
    %45 = arith.cmpi ne, %44, %c0_i32_19 : i32
    scf.if %45 {
      %c0_20 = arith.constant 0 : index
      %c0_21 = arith.constant 0 : index
      %46 = vector.load %arg7[%c0_20, %c0_21] : memref<1x128xf32, #tpu.memory_space<vmem>>, vector<1x128xf32>
      %47 = vector.shape_cast %46 : vector<1x128xf32> to vector<1x1x128xf32>
      %cst_22 = arith.constant dense<0.000000e+00> : vector<1xf32>
      %48 = vector.multi_reduction <add>, %47, %cst_22 [1, 2] : vector<1x1x128xf32> to vector<1xf32>
      %49 = vector.shape_cast %48 : vector<1xf32> to vector<1x1x1xf32>
      %50 = vector.extract %49[0, 0, 0] : f32 from vector<1x1x1xf32>
      %c0_23 = arith.constant 0 : index
      %c0_24 = arith.constant 0 : index
      %51 = vector.load %arg8[%c0_23, %c0_24] : memref<1x128xf32, #tpu.memory_space<vmem>>, vector<1x128xf32>
      %52 = vector.shape_cast %51 : vector<1x128xf32> to vector<1x1x128xf32>
      %cst_25 = arith.constant dense<0.000000e+00> : vector<1xf32>
      %53 = vector.multi_reduction <add>, %52, %cst_25 [1, 2] : vector<1x1x128xf32> to vector<1xf32>
      %54 = vector.shape_cast %53 : vector<1xf32> to vector<1x1x1xf32>
      %55 = vector.extract %54[0, 0, 0] : f32 from vector<1x1x1xf32>
      %56 = arith.mulf %50, %3 : f32
      %57 = arith.addf %2, %56 : f32
      %58 = arith.mulf %1, %57 : f32
      %c0_26 = arith.constant 0 : index
      %c0_27 = arith.constant 0 : index
      %59 = memref.load %arg6[%c0_26, %c0_27] : memref<1x1xf32, #tpu.memory_space<smem>>
      memref.store %58, %arg6[%c0_26, %c0_27] : memref<1x1xf32, #tpu.memory_space<smem>>
      %cst_28 = arith.constant 0.000000e+00 : f32
      %60 = arith.subf %cst_28, %55 : f32
      %61 = arith.mulf %60, %3 : f32
      %c0_29 = arith.constant 0 : index
      %c0_30 = arith.constant 0 : index
      %62 = memref.load %arg5[%c0_29, %c0_30] : memref<1x1xf32, #tpu.memory_space<smem>>
      memref.store %61, %arg5[%c0_29, %c0_30] : memref<1x1xf32, #tpu.memory_space<smem>>
    } else {
    }
    return
  }
  func.func @transform_0(%arg0: i32) -> i32 {
    %c0_i32 = arith.constant 0 : i32
    %c0_i32_0 = arith.constant 0 : i32
    return %c0_i32 : i32
  }
  func.func @transform_1(%arg0: i32) -> i32 {
    %c0_i32 = arith.constant 0 : i32
    %c0_i32_0 = arith.constant 0 : i32
    return %c0_i32 : i32
  }
  func.func @transform_2(%arg0: i32) -> (i32, i32) {
    %c0_i32 = arith.constant 0 : i32
    %c0_i32_0 = arith.constant 0 : i32
    return %c0_i32, %arg0 : i32, i32
  }
  func.func @transform_3(%arg0: i32) -> (i32, i32) {
    %c0_i32 = arith.constant 0 : i32
    %c0_i32_0 = arith.constant 0 : i32
    return %c0_i32, %arg0 : i32, i32
  }
  func.func @transform_4(%arg0: i32) -> (i32, i32) {
    %c0_i32 = arith.constant 0 : i32
    %c0_i32_0 = arith.constant 0 : i32
    %c0_i32_1 = arith.constant 0 : i32
    return %c0_i32, %c0_i32_0 : i32, i32
  }
  func.func @transform_5(%arg0: i32) -> (i32, i32) {
    %c0_i32 = arith.constant 0 : i32
    %c0_i32_0 = arith.constant 0 : i32
    %c0_i32_1 = arith.constant 0 : i32
    return %c0_i32, %c0_i32_0 : i32, i32
  }
}

</mosaic_0001>

<llo_original>
// kernel: tpu_custom_call.1
$region0: #{tpu_custom_call.1}
  #allocation0 [shape = 'u32[]', space=smem, size = 0x4, offset = 0x4, fixed_abs, tag = 'smem constant byte address 0x4 - core index']
  #allocation1 [shape = 'u32[72,128]{1,0:T(1,128)}', space=vmem, size = 0x9000, scoped, tag = 'internal scratch']
  #allocation2 [shape = 'f32[1,128]{1,0:T(1,128)}', space=vmem, size = 0x200, scoped, tag = 'scratch operand']
  #allocation3 [shape = 'f32[1,128]{1,0:T(1,128)}', space=vmem, size = 0x200, scoped, tag = 'scratch operand']
  #allocation4 [shape = 's32[1]{0:T(128)S(6)}', space=smem, size = 0x200, scoped, tag = 'scoped memory for tpu_custom_call.1']
  %s0 = inlined_call_operand.vmem [shape: f32[4], index: 0, kind: input, shape index: {}]
  %s1 = inlined_call_operand.<no memory space> [shape: s32[1], index: 1, kind: input, shape index: {}]
  %s2 = inlined_call_operand.hbm [shape: f32[8,128], index: 2, kind: input, shape index: {}]
  %s3 = inlined_call_operand.hbm [shape: f32[8,128], index: 3, kind: input, shape index: {}]
  %s4 = inlined_call_operand.hbm [shape: f32[1,1], index: 4, kind: output, shape index: {0}]
  %s5 = inlined_call_operand.hbm [shape: f32[1,1], index: 5, kind: output, shape index: {1}]
  %6 = xla_tuple %s4, %s5
  %s7 = sld [smem:[#allocation0]]
  $region54: #{tpu_custom_call.1} parent=0
    _
  %s9 = ssub.s32 1, %s7
  %s10 = scalar_select 0, %s9, %s7
  %11 = sst [smem:[#allocation4]] %s1
  $region1: #{tpu_custom_call.1} parent=0
    #allocation5 [shape = 'u8[512]{0}', space=smem, size = 0x200, scoped, tag = 'input window, operand 0, single buffered']
    #allocation6 [shape = 's32[1]{0}', space=sflag, size = 0x4, scoped, tag = 'scoped memory for tpu_custom_call.1']
    #allocation7 [shape = 's32[1]{0}', space=sflag, size = 0x4, scoped, tag = 'scoped memory for tpu_custom_call.1']
    #allocation8 [shape = 's32[1]{0}', space=sflag, size = 0x4, scoped, tag = 'scoped memory for tpu_custom_call.1']
    #allocation9 [shape = 'u8[4096]{0}', space=vmem, size = 0x1000, scoped, tag = 'input window, operand 2, single buffered']
    #allocation10 [shape = 'u8[4096]{0}', space=vmem, size = 0x1000, scoped, tag = 'input window, operand 3, single buffered']
    #allocation11 [shape = 's32[1]{0}', space=sflag, size = 0x4, scoped, tag = 'scoped memory for tpu_custom_call.1']
    #allocation12 [shape = 'u8[512]{0}', space=smem, size = 0x200, scoped, tag = 'output window, operand 0, single buffered']
    #allocation13 [shape = 'u8[512]{0}', space=smem, size = 0x200, scoped, tag = 'output window, operand 1, single buffered']
    #allocation14 [shape = 's32[1]{0}', space=sflag, size = 0x4, scoped, tag = 'scoped memory for tpu_custom_call.1']
    %12 = vsyncpa [#allocation8], 0
    %13 = vsyncpa [#allocation6], 0
    %14 = vsyncpa [#allocation11], 0
    %15 = vsyncpa [#allocation7], 0
    %16 = vsyncpa [#allocation14], 0
    // Predicated region
    $region2: #{tpu_custom_call.1} parent=1 // pred_check
      _
    $region3: #{tpu_custom_call.1} parent=1 // pred_check_branch
      %18 = sbr.rel (0) target = $region5
    $region4: #{tpu_custom_call.1} parent=1 // pred_region
      %20 = vsyncadd [#allocation8], 0
      %s22 = sshll.u32 %s0, 4
      %s23 = int_to_ptr.vmem [resolvable:$true] %s22
      %25 = dma.vmem_to_smem %s23, 16, [#allocation5], [#allocation8]
    $region5: #{tpu_custom_call.1} parent=1 // pred_fallthru
      _
    // Predicated region
    $region6: #{tpu_custom_call.1} parent=1 // pred_check
      _
    $region7: #{tpu_custom_call.1} parent=1 // pred_check_branch
      %27 = sbr.rel (0) target = $region9
    $region8: #{tpu_custom_call.1} parent=1 // pred_region
      _
    $region9: #{tpu_custom_call.1} parent=1 // pred_fallthru
      _
    // Predicated region
    $region10: #{tpu_custom_call.1} parent=1 // pred_check
      _
    $region11: #{tpu_custom_call.1} parent=1 // pred_check_branch
      %29 = sbr.rel (0) target = $region13
    $region12: #{tpu_custom_call.1} parent=1 // pred_region
      %31 = vsyncadd [#allocation6], 0
      %s33 = sshll.u32 %s2, 4
      %s34 = int_to_ptr.hbm [resolvable:$true] %s33
      %s35 = sshll.u32 [#allocation9], 4
      %s36 = int_to_ptr.vmem [resolvable:$true] %s35
      %38 = dma.hbm_to_vmem [thread:$0]  %s34, 128, %s36, [#allocation6]
    $region13: #{tpu_custom_call.1} parent=1 // pred_fallthru
      _
    // Predicated region
    $region14: #{tpu_custom_call.1} parent=1 // pred_check
      _
    $region15: #{tpu_custom_call.1} parent=1 // pred_check_branch
      %40 = sbr.rel (0) target = $region17
    $region16: #{tpu_custom_call.1} parent=1 // pred_region
      %42 = vsyncadd [#allocation11], 0
      %s44 = sshll.u32 %s3, 4
      %s45 = int_to_ptr.hbm [resolvable:$true] %s44
      %s46 = sshll.u32 [#allocation10], 4
      %s47 = int_to_ptr.vmem [resolvable:$true] %s46
      %49 = dma.hbm_to_vmem [thread:$0]  %s45, 128, %s47, [#allocation11]
    $region17: #{tpu_custom_call.1} parent=1 // pred_fallthru
      _
    // Predicated region
    $region18: #{tpu_custom_call.1} parent=1 // pred_check
      _
    $region19: #{tpu_custom_call.1} parent=1 // pred_check_branch
      %51 = sbr.rel (0) target = $region21
    $region20: #{tpu_custom_call.1} parent=1 // pred_region
      %53 = dma.done [#allocation8], 16
    $region21: #{tpu_custom_call.1} parent=1 // pred_fallthru
      _
    // Predicated region
    $region22: #{tpu_custom_call.1} parent=1 // pred_check
      _
    $region23: #{tpu_custom_call.1} parent=1 // pred_check_branch
      %55 = sbr.rel (0) target = $region25
    $region24: #{tpu_custom_call.1} parent=1 // pred_region
      %57 = dma.done [#allocation6], 128
    $region25: #{tpu_custom_call.1} parent=1 // pred_fallthru
      _
    // Predicated region
    $region26: #{tpu_custom_call.1} parent=1 // pred_check
      _
    $region27: #{tpu_custom_call.1} parent=1 // pred_check_branch
      %59 = sbr.rel (0) target = $region29
    $region28: #{tpu_custom_call.1} parent=1 // pred_region
      %61 = dma.done [#allocation11], 128
    $region29: #{tpu_custom_call.1} parent=1 // pred_fallthru
      _
    %62 = sfence
    %s63 = sld [smem:[#allocation5]]
    %s64 = sld [smem:[#allocation5 + $0x1]]
    %s65 = sld [smem:[#allocation5 + $0x2]]
    %s66 = sld [smem:[#allocation5 + $0x3]]
    %s67 = sld [smem:[#allocation4]]
    %p68 = scmp.eq.s32.totalorder 0, 0
    // Predicated region
    $region30: #{tpu_custom_call.1} parent=1 // pred_check
      %p69 = pneg %p68
    $region31: #{tpu_custom_call.1} parent=1 // pred_check_branch
      %71 = sbr.rel (%p69) target = $region33
    $region32: #{tpu_custom_call.1} parent=1 // pred_region
      %72 = vst [vmem:[#allocation2] sm:$0x1] 0.0
      %73 = vst [vmem:[#allocation3] sm:$0x1] 0.0
    $region33: #{tpu_custom_call.1} parent=1 // pred_fallthru
      _
    %v74 = vld [vmem:[#allocation9] sm:$0xff]
    %v75 = vld [vmem:[#allocation10] sm:$0xff]
    %v76 = vstv %s63
    %v77 = vmul.f32 %v74, %v76
    %v78 = vrot.slane %v77, 4
    %v79 = vmax.f32 %v77, %v78
    %v80 = vrot.slane %v79, 2
    %v81 = vmax.f32 %v79, %v80
    %v82 = vrot.slane %v81, 1
    %v83 = vmax.f32 %v81, %v82
    %v84 = vsub.f32 %v77, %v83
    %v85 = vmul.f32 %v84, 1.442695
    %v86 = vpow.pop %v85
    %v87 = vrot.slane %v86, 4
    %v88 = vadd.f32 %v86, %v87
    %v89 = vrot.slane %v88, 2
    %v90 = vadd.f32 %v88, %v89
    %v91 = vrot.slane %v90, 1
    %v92 = vadd.f32 %v90, %v91
    %v93 = vlog2.pop %v92
    %v94 = vmul.f32 %v93, 0.6931472
    %v95 = vadd.f32 %v83, %v94
    %v96 = vrcp.pop %v92
    %v97 = vmul.f32 %v86, %v96
    %v98 = vmul.f32 %v97, %v75
    %v99 = vrot.slane %v98, 4
    %v100 = vadd.f32 %v98, %v99
    %v101 = vrot.slane %v100, 2
    %v102 = vadd.f32 %v100, %v101
    %v103 = vrot.slane %v102, 1
    %v104 = vadd.f32 %v102, %v103
    %v105 = vlaneseq
    %v106 = vand.u32 %v105, 127
    %s107 = smul.u32 0, 128
    %v108 = vstv %s107
    %v109 = vadd.s32 %v106, %v108
    %v110 = vstv %s67
    %vm111 = vcmp.lt.s32.totalorder %v109, %v110
    %v112 = vsel %vm111, %v95, 0.0
    %v113 = vsel %vm111, %v104, 0.0
    %v114 = vld [vmem:[#allocation2] sm:$0x1]
    %v115 = vadd.f32 %v114, %v112
    %116 = vst [vmem:[#allocation2] sm:$0x1] %v115
    %v117 = vld [vmem:[#allocation3] sm:$0x1]
    %v118 = vadd.f32 %v117, %v113
    %119 = vst [vmem:[#allocation3] sm:$0x1] %v118
    // Predicated region
    $region34: #{tpu_custom_call.1} parent=1 // pred_check
      %p120 = pneg %p68
    $region35: #{tpu_custom_call.1} parent=1 // pred_check_branch
      %122 = sbr.rel (%p120) target = $region37
    $region36: #{tpu_custom_call.1} parent=1 // pred_region
      %v123 = vld [vmem:[#allocation2] sm:$0x1]
      %vm124 = vcmask 1040384
      %v125 = vsel %vm124, %v123, 0.0
      %126 = vadd.xlane.f32.xlu0 %v125
      %v127 = vpop.xlane.xlu0 %126
      %v128 = vrot.slane %v127, 4
      %v129 = vadd.f32 %v127, %v128
      %v130 = vrot.slane %v129, 2
      %v131 = vadd.f32 %v129, %v130
      %v132 = vrot.slane %v131, 1
      %v133 = vadd.f32 %v131, %v132
      %s134 = vtos %v133
      %v135 = vld [vmem:[#allocation3] sm:$0x1]
      %v136 = vsel %vm124, %v135, 0.0
      %137 = vadd.xlane.f32.xlu0 %v136
      %v138 = vpop.xlane.xlu0 %137
      %v139 = vrot.slane %v138, 4
      %v140 = vadd.f32 %v138, %v139
      %v141 = vrot.slane %v140, 2
      %v142 = vadd.f32 %v140, %v141
      %v143 = vrot.slane %v142, 1
      %v144 = vadd.f32 %v142, %v143
      %s145 = vtos %v144
      %s146 = smul.f32 %s134, %s66
      %s147 = sadd.f32 %s65, %s146
      %s148 = smul.f32 %s64, %s147
      %s149 = scalar_lea.smem [#allocation13], 0
      %150 = sst [smem:[%s149]] %s148
      %s151 = ssub.f32 0.0, %s145
      %s152 = smul.f32 %s151, %s66
      %s153 = scalar_lea.smem [#allocation12], 0
      %154 = sst [smem:[%s153]] %s152
    $region37: #{tpu_custom_call.1} parent=1 // pred_fallthru
      _
    // Predicated region
    $region38: #{tpu_custom_call.1} parent=1 // pred_check
      _
    $region39: #{tpu_custom_call.1} parent=1 // pred_check_branch
      %156 = sbr.rel (0) target = $region41
    $region40: #{tpu_custom_call.1} parent=1 // pred_region
      %158 = vsyncadd [#allocation7], 0
      %s160 = sshll.u32 %s4, 4
      %s161 = int_to_ptr.hbm [resolvable:$true] %s160
      %163 = dma.smem_to_hbm [#allocation12], 16, %s161, [#allocation7]
    $region41: #{tpu_custom_call.1} parent=1 // pred_fallthru
      _
    // Predicated region
    $region42: #{tpu_custom_call.1} parent=1 // pred_check
      _
    $region43: #{tpu_custom_call.1} parent=1 // pred_check_branch
      %165 = sbr.rel (0) target = $region45
    $region44: #{tpu_custom_call.1} parent=1 // pred_region
      %167 = vsyncadd [#allocation14], 0
      %s169 = sshll.u32 %s5, 4
      %s170 = int_to_ptr.hbm [resolvable:$true] %s169
      %172 = dma.smem_to_hbm [#allocation13], 16, %s170, [#allocation14]
    $region45: #{tpu_custom_call.1} parent=1 // pred_fallthru
      _
    // Predicated region
    $region46: #{tpu_custom_call.1} parent=1 // pred_check
      _
    $region47: #{tpu_custom_call.1} parent=1 // pred_check_branch
      %174 = sbr.rel (0) target = $region49
    $region48: #{tpu_custom_call.1} parent=1 // pred_region
      %176 = dma.done [#allocation7], 16
    $region49: #{tpu_custom_call.1} parent=1 // pred_fallthru
      _
    // Predicated region
    $region50: #{tpu_custom_call.1} parent=1 // pred_check
      _
    $region51: #{tpu_custom_call.1} parent=1 // pred_check_branch
      %178 = sbr.rel (0) target = $region53
    $region52: #{tpu_custom_call.1} parent=1 // pred_region
      %180 = dma.done [#allocation14], 16
    $region53: #{tpu_custom_call.1} parent=1 // pred_fallthru
      _
    %181 = sfence
    %182 = vsyncpa [#allocation6], 1
    %183 = vsyncpa [#allocation11], 1
    %184 = vsyncpa [#allocation7], 1
    %185 = vsyncpa [#allocation14], 1
    %186 = vsyncpa [#allocation8], 1

</llo_original>
